<compile_context>
chip_gen: v7x
topology: tpu7x:2x2x1
jax: 0.10.0
libtpu: 0.0.40
codegen_flags: <defaults>
</compile_context>

<pallas_src>
import functools

import jax
import jax.numpy as jnp
from jax.experimental import pallas as pl
from jax.experimental.pallas import tpu as pltpu


# ---------------------------------------------------------------------------
# Kernel
# ---------------------------------------------------------------------------
def _make_proto_head_kernel(true_c, k_pad):
    """Build the per-grid-step kernel; `true_c` is the UNPADDED feature dim."""
    inv_c = 1.0 / float(true_c)

    def kernel(lab_ref, sup_ref, qry_ref, scores_ref):
        sup = sup_ref[...]        # [Bb, Ns, Cp] f32 (zero-padded features)
        qry = qry_ref[...]        # [Bb, Nq, Cp] f32 (zero-padded features)
        labels = lab_ref[...]     # [Bb, Ns, 1]  int32

        bb, ns, _ = sup.shape

        # Class mask built in-kernel from int labels (cheap VPU iota-compare).
        # Padded classes (k >= K) never match -> inert zero columns.
        iota_k = jax.lax.broadcasted_iota(jnp.int32, (bb, ns, k_pad), 2)
        mask = (iota_k == labels).astype(jnp.float32)          # [Bb, Ns, Kp]

        # Row-shaped squared norms (zero-padded feature columns contribute 0).
        qq = jnp.sum(qry * qry, axis=-1, keepdims=True)        # [Bb, Nq, 1]
        ss = jnp.sum(sup * sup, axis=-1, keepdims=True)        # [Bb, Ns, 1]

        counts = jnp.sum(mask, axis=1, keepdims=True)          # [Bb, 1, Kp]
        ss_cls = jnp.sum(mask * ss, axis=1, keepdims=True)     # [Bb, 1, Kp]

        # W^T in [Bb, Cp, Kp]: fold the (2/C) scale into the tiny support tile
        # before the matmul, and transpose that small tile explicitly so the
        # big matmul below is a native [Nq,Cp] x [Cp,Kp] MXU op (no hidden
        # vxpose of W).
        sup_t = jnp.swapaxes(sup * (2.0 * inv_c), 1, 2)        # [Bb, Cp, Ns]
        w_t = jnp.einsum('bcs,bsk->bck', sup_t, mask,
                         preferred_element_type=jnp.float32)   # [Bb, Cp, Kp]
        qw = jnp.einsum('bqc,bck->bqk', qry, w_t,
                        preferred_element_type=jnp.float32)    # [Bb, Nq, Kp]

        # scores = -(1/C)*(||q||^2*counts + sum_cls||s||^2 - 2*q.W^T)
        qqn = qq * inv_c                                       # [Bb, Nq, 1]
        ssn = ss_cls * inv_c                                   # [Bb, 1, Kp]
        scores_ref[...] = qw - qqn * counts - ssn

    return kernel


# ---------------------------------------------------------------------------
# Hardware-aware sizing helpers
# ---------------------------------------------------------------------------
def _tpu_hw_info():
    """(physical VMEM bytes, # TensorCores per chip) with safe fallbacks."""
    vmem_bytes = 64 * 1024 * 1024   # conservative default = v7x physical
    num_tc = 1
    try:
        info = pltpu.get_tpu_info()
        vmem_bytes = int(getattr(info, "vmem_capacity_bytes", vmem_bytes))
    except Exception:
        pass
    try:
        kind = jax.devices()[0].device_kind.lower()
        if "v7" in kind or "7x" in kind:
            num_tc = 2              # v7x: 2 TensorCores per chip
    except Exception:
        pass
    return vmem_bytes, num_tc


# ---------------------------------------------------------------------------
# Wrapper
# ---------------------------------------------------------------------------
def proto_head_scores(support_features, query_features, support_labels,
                      num_classes, *, block_b=None):
    """scores_cls with shape [B, Nq, K] — same math as the PyTorch module.

    `support_labels` are int class ids [B, Ns]; `num_classes` = K.
    """
    support_features = support_features.astype(jnp.float32)
    query_features = query_features.astype(jnp.float32)
    labels = support_labels.astype(jnp.int32)

    B, Nq, C = query_features.shape
    _, Ns = labels.shape
    K = int(num_classes)

    # Lane-dense padding: classes to next multiple of 128, features likewise.
    k_pad = max(128, int(pl.cdiv(K, 128)) * 128)
    c_pad = max(128, int(pl.cdiv(C, 128)) * 128)

    sup, qry = support_features, query_features
    if c_pad != C:  # zero feature columns contribute 0 to norms & dots
        sup = jnp.pad(sup, ((0, 0), (0, 0), (0, c_pad - C)))
        qry = jnp.pad(qry, ((0, 0), (0, 0), (0, c_pad - C)))
    lab3 = labels.reshape(B, Ns, 1)

    # ---- VMEM-budgeted block sizing (per TPU generation) -------------------
    vmem_bytes, num_tc = _tpu_hw_info()
    vmem_limit = min(vmem_bytes - (16 << 20), 100 << 20)   # 48 MiB on v7x,
    vmem_limit = max(vmem_limit, 32 << 20)                  # ~100 MiB on v5e/v6e
    budget = (vmem_limit * 3) // 4

    # double-buffered pipelined blocks + single-buffered in-kernel temps
    dbuf_elems = (Ns + Nq) * c_pad + Ns + Nq * k_pad
    interm_elems = 2 * Ns * k_pad + 2 * Ns * c_pad + c_pad * k_pad + 3 * Nq * k_pad
    per_ep_bytes = 4 * (2 * dbuf_elems + interm_elems)

    if block_b is None:
        bb_vmem = max(1, int(budget // per_ep_bytes))
        if num_tc >= 2 and B >= 2:
            # v7x: keep an even number of grid steps so both TCs stay busy.
            grid_b = max(2, int(pl.cdiv(B, bb_vmem)))
            grid_b += grid_b % 2
            block_b = int(pl.cdiv(B, grid_b))
        else:
            # Single TC (v5e/v6e): biggest block that fits, no forced split.
            block_b = int(min(bb_vmem, B))
            grid_b = int(pl.cdiv(B, block_b))
    else:
        block_b = int(block_b)
        grid_b = int(pl.cdiv(B, block_b))

    b_pad = grid_b * block_b
    if b_pad != B:
        pad = b_pad - B
        sup = jnp.pad(sup, ((0, pad), (0, 0), (0, 0)))
        qry = jnp.pad(qry, ((0, pad), (0, 0), (0, 0)))
        lab3 = jnp.pad(lab3, ((0, pad), (0, 0), (0, 0)))

    kernel = _make_proto_head_kernel(C, k_pad)   # true C baked in for 1/C

    scores = pl.pallas_call(
        kernel,
        out_shape=jax.ShapeDtypeStruct((b_pad, Nq, k_pad), jnp.float32),
        grid=(grid_b,),
        in_specs=[
            pl.BlockSpec((block_b, Ns, 1), lambda b: (b, 0, 0)),      # labels
            pl.BlockSpec((block_b, Ns, c_pad), lambda b: (b, 0, 0)),  # support
            pl.BlockSpec((block_b, Nq, c_pad), lambda b: (b, 0, 0)),  # query
        ],
        out_specs=pl.BlockSpec((block_b, Nq, k_pad), lambda b: (b, 0, 0)),
        compiler_params=pltpu.CompilerParams(
            dimension_semantics=("parallel",),
            vmem_limit_bytes=int(vmem_limit)),
    )(lab3, sup, qry)

    # Strip episode padding and padded class columns BEFORE any loss/argmax.
    return scores[:B, :, :K]


def proto_head_forward(support_features, support_labels, query_features,
                       query_labels, support_labels_one_hot, scale_cls=None):
    """Mirrors ProtoHead.forward; returns dict with loss/accuracy/preds/gts.

    `scale_cls` is accepted for interface parity but unused: in the PyTorch
    module it only scales `scores_cls2`, which is computed then discarded
    (dead code), so it never affects the returned loss/accuracy/predictions.
    """
    del scale_cls  # dead branch in the reference module
    B, Nq, _ = query_features.shape
    K = support_labels_one_hot.shape[-1]

    # The reference only consumes the one-hot; recover int labels from it so
    # semantics match even if `support_labels` were inconsistent.
    labels_int = jnp.argmax(support_labels_one_hot, axis=-1).astype(jnp.int32)
    del support_labels

    scores_cls = proto_head_scores(support_features, query_features,
                                   labels_int, K)

    flat_scores = scores_cls.reshape(B * Nq, K)
    flat_labels = query_labels.reshape(B * Nq)

    # CrossEntropyLoss (mean over B*Nq examples) — plain-JAX glue.
    log_z = jax.scipy.special.logsumexp(flat_scores, axis=1)
    picked = jnp.take_along_axis(flat_scores, flat_labels[:, None], axis=1)[:, 0]
    loss = jnp.mean(log_z - picked)

    pred = jnp.argmax(flat_scores, axis=1)
    accuracy = jnp.mean((pred == flat_labels).astype(jnp.float32))

    return {
        "loss": loss,
        "accuracy": accuracy,
        "pred_labels": pred,
        "gt_labels": flat_labels,
    }


# ---------------------------------------------------------------------------
# Pure-JAX reference (direct translation of the PyTorch raw_relations path)
# ---------------------------------------------------------------------------
def _reference_scores(sup, qry, one_hot):
    diff = qry[:, :, None, :] - sup[:, None, :, :]
    raw_rel = -jnp.sum(diff * diff, axis=-1) / qry.shape[-1]     # [B, Nq, Ns]
    return jnp.einsum('bqs,bsk->bqk', raw_rel, one_hot)          # [B, Nq, K]


if __name__ == "__main__":
    key = jax.random.PRNGKey(0)
    k1, k2, k3 = jax.random.split(key, 3)

    # small episode: 2 episodes, 4-way / 2-shot support, 8 queries, 32-dim feats
    B, K, shots, Nq, C = 2, 4, 2, 8, 32
    Ns = K * shots

    support_features = jax.random.normal(k1, (B, Ns, C), dtype=jnp.float32)
    query_features = jax.random.normal(k2, (B, Nq, C), dtype=jnp.float32)
    support_labels = jnp.tile(jnp.arange(K, dtype=jnp.int32), (B, shots))   # [B, Ns]
    support_labels_one_hot = jax.nn.one_hot(support_labels, K, dtype=jnp.float32)
    query_labels = jax.random.randint(k3, (B, Nq), 0, K, dtype=jnp.int32)
    scale_cls = jnp.array([1.0], dtype=jnp.float32)   # module param (dead branch)

    # kernel vs pure-JAX reference
    scores = proto_head_scores(support_features, query_features,
                               support_labels, K)
    ref = _reference_scores(support_features, query_features,
                            support_labels_one_hot)
    jax.block_until_ready(scores)
    assert scores.shape == (B, Nq, K)
    assert jnp.allclose(scores, ref, atol=1e-3, rtol=1e-3), \
        float(jnp.max(jnp.abs(scores - ref)))

    res = proto_head_forward(support_features, support_labels, query_features,
                             query_labels, support_labels_one_hot, scale_cls)
    jax.block_until_ready(res["loss"])
    jax.block_until_ready(res["pred_labels"])
    print("KERNEL_OK")
</pallas_src>

<mosaic_0001>
module attributes {stable_mosaic.version = 11 : i64} {
  func.func @kernel(%arg0: i32, %arg1: memref<2x8x1xi32, #tpu.memory_space<vmem>>, %arg2: memref<2x8x128xf32, #tpu.memory_space<vmem>>, %arg3: memref<2x8x128xf32, #tpu.memory_space<vmem>>, %arg4: memref<2x8x128xf32, #tpu.memory_space<vmem>>) attributes {dimension_semantics = [#tpu.dimension_semantics<parallel>], iteration_bounds = array<i64: 1>, scalar_prefetch = 0 : i64, scratch_operands = 0 : i64, tpu.core_type = #tpu.core_type<tc>, window_params = [{transform_indices = @transform_0, window_bounds = array<i64: 2, 8, 1>}, {transform_indices = @transform_1, window_bounds = array<i64: 2, 8, 128>}, {transform_indices = @transform_2, window_bounds = array<i64: 2, 8, 128>}, {transform_indices = @transform_3, window_bounds = array<i64: 2, 8, 128>}]} {
    %c0 = arith.constant 0 : index
    %c0_0 = arith.constant 0 : index
    %c0_1 = arith.constant 0 : index
    %0 = vector.load %arg2[%c0, %c0_0, %c0_1] : memref<2x8x128xf32, #tpu.memory_space<vmem>>, vector<2x8x128xf32>
    %c0_2 = arith.constant 0 : index
    %c0_3 = arith.constant 0 : index
    %c0_4 = arith.constant 0 : index
    %1 = vector.load %arg3[%c0_2, %c0_3, %c0_4] : memref<2x8x128xf32, #tpu.memory_space<vmem>>, vector<2x8x128xf32>
    %c0_5 = arith.constant 0 : index
    %c0_6 = arith.constant 0 : index
    %c0_7 = arith.constant 0 : index
    %2 = vector.load %arg1[%c0_5, %c0_6, %c0_7] : memref<2x8x1xi32, #tpu.memory_space<vmem>>, vector<2x8x1xi32>
    %3 = tpu.iota {dimensions = array<i32: 2>} : vector<2x8x128xi32>
    %4 = vector.broadcast %2 : vector<2x8x1xi32> to vector<2x8x128xi32>
    %5 = arith.cmpi eq, %3, %4 : vector<2x8x128xi32>
    %6 = arith.extui %5 : vector<2x8x128xi1> to vector<2x8x128xi32>
    %7 = arith.sitofp %6 : vector<2x8x128xi32> to vector<2x8x128xf32>
    %8 = arith.mulf %1, %1 : vector<2x8x128xf32>
    %cst = arith.constant dense<0.000000e+00> : vector<2x8xf32>
    %9 = vector.multi_reduction <add>, %8, %cst [2] : vector<2x8x128xf32> to vector<2x8xf32>
    %10 = vector.shape_cast %9 : vector<2x8xf32> to vector<2x8x1xf32>
    %11 = arith.mulf %0, %0 : vector<2x8x128xf32>
    %cst_8 = arith.constant dense<0.000000e+00> : vector<2x8xf32>
    %12 = vector.multi_reduction <add>, %11, %cst_8 [2] : vector<2x8x128xf32> to vector<2x8xf32>
    %13 = vector.shape_cast %12 : vector<2x8xf32> to vector<2x8x1xf32>
    %cst_9 = arith.constant dense<0.000000e+00> : vector<2x128xf32>
    %14 = vector.multi_reduction <add>, %7, %cst_9 [1] : vector<2x8x128xf32> to vector<2x128xf32>
    %15 = vector.shape_cast %14 : vector<2x128xf32> to vector<2x1x128xf32>
    %16 = vector.broadcast %13 : vector<2x8x1xf32> to vector<2x8x128xf32>
    %17 = arith.mulf %7, %16 : vector<2x8x128xf32>
    %cst_10 = arith.constant dense<0.000000e+00> : vector<2x128xf32>
    %18 = vector.multi_reduction <add>, %17, %cst_10 [1] : vector<2x8x128xf32> to vector<2x128xf32>
    %19 = vector.shape_cast %18 : vector<2x128xf32> to vector<2x1x128xf32>
    %cst_11 = arith.constant 6.250000e-02 : f32
    %20 = vector.broadcast %cst_11 : f32 to vector<2x8x128xf32>
    %21 = arith.mulf %0, %20 : vector<2x8x128xf32>
    %22 = tpu.transpose %21, [0, 2, 1] : vector<2x8x128xf32> -> vector<2x128x8xf32>
    "tpu.trace_start"() <{level = 10 : i32, message = "bcs,bsk->bck"}> : () -> ()
    %cst_12 = arith.constant dense<0.000000e+00> : vector<2x128x128xf32>
    %23 = tpu.matmul %22, %7, %cst_12 {dimension_numbers = #tpu.dot_dimension_numbers<[2], [1], [1], [2], [0, 0, 0, 1, 1, 2], [0], [0]>} : vector<2x128x8xf32>, vector<2x8x128xf32>, vector<2x128x128xf32> -> vector<2x128x128xf32>
    "tpu.trace_stop"() : () -> ()
    "tpu.trace_start"() <{level = 10 : i32, message = "bqc,bck->bqk"}> : () -> ()
    %cst_13 = arith.constant dense<0.000000e+00> : vector<2x8x128xf32>
    %24 = tpu.matmul %1, %23, %cst_13 {dimension_numbers = #tpu.dot_dimension_numbers<[2], [1], [1], [2], [0, 0, 0, 1, 1, 2], [0], [0]>} : vector<2x8x128xf32>, vector<2x128x128xf32>, vector<2x8x128xf32> -> vector<2x8x128xf32>
    "tpu.trace_stop"() : () -> ()
    %cst_14 = arith.constant 3.125000e-02 : f32
    %25 = vector.broadcast %cst_14 : f32 to vector<2x8x1xf32>
    %26 = arith.mulf %10, %25 : vector<2x8x1xf32>
    %cst_15 = arith.constant 3.125000e-02 : f32
    %27 = vector.broadcast %cst_15 : f32 to vector<2x1x128xf32>
    %28 = arith.mulf %19, %27 : vector<2x1x128xf32>
    %29 = vector.broadcast %26 : vector<2x8x1xf32> to vector<2x8x128xf32>
    %30 = vector.broadcast %15 : vector<2x1x128xf32> to vector<2x8x128xf32>
    %31 = arith.mulf %29, %30 : vector<2x8x128xf32>
    %32 = arith.subf %24, %31 : vector<2x8x128xf32>
    %33 = vector.broadcast %28 : vector<2x1x128xf32> to vector<2x8x128xf32>
    %34 = arith.subf %32, %33 : vector<2x8x128xf32>
    %c0_16 = arith.constant 0 : index
    %c0_17 = arith.constant 0 : index
    %c0_18 = arith.constant 0 : index
    %35 = vector.load %arg4[%c0_16, %c0_17, %c0_18] : memref<2x8x128xf32, #tpu.memory_space<vmem>>, vector<2x8x128xf32>
    tpu.vector_store %arg4[%c0_16, %c0_17, %c0_18], %34 {strides = array<i32>} : memref<2x8x128xf32, #tpu.memory_space<vmem>>, vector<2x8x128xf32>,
    return
  }
  func.func @transform_0(%arg0: i32) -> (i32, i32, i32) {
    %c0_i32 = arith.constant 0 : i32
    %c0_i32_0 = arith.constant 0 : i32
    %c0_i32_1 = arith.constant 0 : i32
    return %arg0, %c0_i32, %c0_i32_0 : i32, i32, i32
  }
  func.func @transform_1(%arg0: i32) -> (i32, i32, i32) {
    %c0_i32 = arith.constant 0 : i32
    %c0_i32_0 = arith.constant 0 : i32
    %c0_i32_1 = arith.constant 0 : i32
    return %arg0, %c0_i32, %c0_i32_0 : i32, i32, i32
  }
  func.func @transform_2(%arg0: i32) -> (i32, i32, i32) {
    %c0_i32 = arith.constant 0 : i32
    %c0_i32_0 = arith.constant 0 : i32
    %c0_i32_1 = arith.constant 0 : i32
    return %arg0, %c0_i32, %c0_i32_0 : i32, i32, i32
  }
  func.func @transform_3(%arg0: i32) -> (i32, i32, i32) {
    %c0_i32 = arith.constant 0 : i32
    %c0_i32_0 = arith.constant 0 : i32
    %c0_i32_1 = arith.constant 0 : i32
    return %arg0, %c0_i32, %c0_i32_0 : i32, i32, i32
  }
}

</mosaic_0001>

<llo_original>
// kernel: tpu_custom_call.1
$region0: #{tpu_custom_call.1}
  #allocation0 [shape = 'u32[]', space=smem, size = 0x4, offset = 0x4, fixed_abs, tag = 'smem constant byte address 0x4 - core index']
  #allocation1 [shape = 'u32[144,128]{1,0:T(1,128)}', space=vmem, size = 0x12000, scoped, tag = 'internal scratch']
  %s0 = inlined_call_operand.vmem [shape: s32[2,8,1], index: 0, kind: input, shape index: {}]
  %s1 = inlined_call_operand.vmem [shape: f32[2,8,128], index: 1, kind: input, shape index: {}]
  %s2 = inlined_call_operand.hbm [shape: f32[2,8,128], index: 2, kind: input, shape index: {}]
  %s3 = inlined_call_operand.hbm [shape: f32[2,8,128], index: 3, kind: output, shape index: {}]
  %s4 = sld [smem:[#allocation0]]
  $region26: #{tpu_custom_call.1} parent=0
    _
  %s6 = ssub.s32 1, %s4
  %s7 = scalar_select 0, %s6, %s4
  $region1: #{tpu_custom_call.1} parent=0
    #allocation2 [shape = 'u8[8192]{0}', space=vmem, size = 0x2000, scoped, tag = 'input window, operand 2, single buffered']
    #allocation3 [shape = 's32[1]{0}', space=sflag, size = 0x4, scoped, tag = 'scoped memory for tpu_custom_call.1']
    #allocation4 [shape = 's32[1]{0}', space=sflag, size = 0x4, scoped, tag = 'scoped memory for tpu_custom_call.1']
    #allocation5 [shape = 'u8[8192]{0}', space=vmem, size = 0x2000, scoped, tag = 'output window, operand 0, single buffered']
    %8 = vsyncpa [#allocation3], 0
    %9 = vsyncpa [#allocation4], 0
    // Predicated region
    $region2: #{tpu_custom_call.1} parent=1 // pred_check
      _
    $region3: #{tpu_custom_call.1} parent=1 // pred_check_branch
      %11 = sbr.rel (0) target = $region5
    $region4: #{tpu_custom_call.1} parent=1 // pred_region
      _
    $region5: #{tpu_custom_call.1} parent=1 // pred_fallthru
      _
    // Predicated region
    $region6: #{tpu_custom_call.1} parent=1 // pred_check
      _
    $region7: #{tpu_custom_call.1} parent=1 // pred_check_branch
      %13 = sbr.rel (0) target = $region9
    $region8: #{tpu_custom_call.1} parent=1 // pred_region
      _
    $region9: #{tpu_custom_call.1} parent=1 // pred_fallthru
      _
    // Predicated region
    $region10: #{tpu_custom_call.1} parent=1 // pred_check
      _
    $region11: #{tpu_custom_call.1} parent=1 // pred_check_branch
      %15 = sbr.rel (0) target = $region13
    $region12: #{tpu_custom_call.1} parent=1 // pred_region
      %s17 = ssub.s32 256, 256
      %18 = vsyncadd [#allocation3], %s17
      %s19 = sshll.u32 [#allocation2], 4
      %s20 = int_to_ptr.vmem [resolvable:$true] %s19
      %25 = dma.hbm_to_vmem [thread:$0]  %s2, 256, %s20, [#allocation3], 128, 128, 8
    $region13: #{tpu_custom_call.1} parent=1 // pred_fallthru
      _
    // Predicated region
    $region14: #{tpu_custom_call.1} parent=1 // pred_check
      _
    $region15: #{tpu_custom_call.1} parent=1 // pred_check_branch
      %27 = sbr.rel (0) target = $region17
    $region16: #{tpu_custom_call.1} parent=1 // pred_region
      %28 = dma.done [#allocation3], 256
    $region17: #{tpu_custom_call.1} parent=1 // pred_fallthru
      _
    %v29 = vld [vmem:[%s1] sm:$0xff]
    %v30 = vld [vmem:[%s1 + $0x8] sm:$0xff]
    %v31 = vld [vmem:[#allocation2] sm:$0xff]
    %v32 = vld [vmem:[#allocation2 + $0x8] sm:$0xff]
    %v33 = vld [vmem:[%s0] sm:$0xff]
    %v34 = vld [vmem:[%s0 + $0x8] sm:$0xff]
    %v35 = vlaneseq
    %v36 = vand.u32 %v35, 127
    %37 = vset.pattern.permute.xlu0 0
    %38 = vperm.xlu0 %37, %v33
    %v39 = vpop.permute.xlu0 %38
    %40 = vset.pattern.permute.xlu0 0
    %41 = vperm.xlu0 %40, %v34
    %v42 = vpop.permute.xlu0 %41
    %vm43 = vcmp.eq.s32.totalorder %v36, %v39
    %vm44 = vcmp.eq.s32.totalorder %v36, %v42
    %v45 = vsel %vm43, 1, 0
    %v46 = vsel %vm44, 1, 0
    %v47 = vcvt.s32.f32 %v45
    %v48 = vcvt.s32.f32 %v46
    %v49 = vmul.f32 %v31, %v31
    %v50 = vmul.f32 %v32, %v32
    %51 = vadd.xlane.f32.xlu0 %v49
    %v52 = vpop.xlane.xlu0 %51
    %53 = vadd.xlane.f32.xlu0 %v50
    %v54 = vpop.xlane.xlu0 %53
    %v55 = vmul.f32 %v29, %v29
    %v56 = vmul.f32 %v30, %v30
    %57 = vadd.xlane.f32.xlu0 %v55
    %v58 = vpop.xlane.xlu0 %57
    %59 = vadd.xlane.f32.xlu0 %v56
    %v60 = vpop.xlane.xlu0 %59
    %v61 = vrot.slane %v47, 4
    %v62 = vadd.f32 %v47, %v61
    %v63 = vrot.slane %v62, 2
    %v64 = vadd.f32 %v62, %v63
    %v65 = vrot.slane %v64, 1
    %v66 = vadd.f32 %v64, %v65
    %v67 = vrot.slane %v48, 4
    %v68 = vadd.f32 %v48, %v67
    %v69 = vrot.slane %v68, 2
    %v70 = vadd.f32 %v68, %v69
    %v71 = vrot.slane %v70, 1
    %v72 = vadd.f32 %v70, %v71
    %v73 = vmul.f32 %v47, %v58
    %v74 = vmul.f32 %v48, %v60
    %v75 = vrot.slane %v73, 4
    %v76 = vadd.f32 %v73, %v75
    %v77 = vrot.slane %v76, 2
    %v78 = vadd.f32 %v76, %v77
    %v79 = vrot.slane %v78, 1
    %v80 = vadd.f32 %v78, %v79
    %v81 = vrot.slane %v74, 4
    %v82 = vadd.f32 %v74, %v81
    %v83 = vrot.slane %v82, 2
    %v84 = vadd.f32 %v82, %v83
    %v85 = vrot.slane %v84, 1
    %v86 = vadd.f32 %v84, %v85
    %v87 = vmul.f32 %v29, 0.0625
    %v88 = vmul.f32 %v30, 0.0625
    %89 = vxpose.xlu0.b32.start [1/16] %v87, 128
    %90 = vxpose.xlu0.b32.cont [2/16] 0.0, 128
    %91 = vxpose.xlu0.b32.cont [3/16] 0.0, 128
    %92 = vxpose.xlu0.b32.cont [4/16] 0.0, 128
    %93 = vxpose.xlu0.b32.cont [5/16] 0.0, 128
    %94 = vxpose.xlu0.b32.cont [6/16] 0.0, 128
    %95 = vxpose.xlu0.b32.cont [7/16] 0.0, 128
    %96 = vxpose.xlu0.b32.cont [8/16] 0.0, 128
    %97 = vxpose.xlu0.b32.cont [9/16] 0.0, 128
    %98 = vxpose.xlu0.b32.cont [10/16] 0.0, 128
    %99 = vxpose.xlu0.b32.cont [11/16] 0.0, 128
    %100 = vxpose.xlu0.b32.cont [12/16] 0.0, 128
    %101 = vxpose.xlu0.b32.cont [13/16] 0.0, 128
    %102 = vxpose.xlu0.b32.cont [14/16] 0.0, 128
    %103 = vxpose.xlu0.b32.cont [15/16] 0.0, 128
    %104 = vxpose.xlu0.b32.end [16/16] 0.0, 128
    %v105 = vpop.trf.xlu0
    %v106 = vpop.trf.xlu0
    %v107 = vpop.trf.xlu0
    %v108 = vpop.trf.xlu0
    %v109 = vpop.trf.xlu0
    %v110 = vpop.trf.xlu0
    %v111 = vpop.trf.xlu0
    %v112 = vpop.trf.xlu0
    %v113 = vpop.trf.xlu0
    %v114 = vpop.trf.xlu0
    %v115 = vpop.trf.xlu0
    %v116 = vpop.trf.xlu0
    %v117 = vpop.trf.xlu0
    %v118 = vpop.trf.xlu0
    %v119 = vpop.trf.xlu0
    %v120 = vpop.trf.xlu0
    %121 = vxpose.xlu0.b32.start [1/16] %v88, 128
    %122 = vxpose.xlu0.b32.cont [2/16] 0.0, 128
    %123 = vxpose.xlu0.b32.cont [3/16] 0.0, 128
    %124 = vxpose.xlu0.b32.cont [4/16] 0.0, 128
    %125 = vxpose.xlu0.b32.cont [5/16] 0.0, 128
    %126 = vxpose.xlu0.b32.cont [6/16] 0.0, 128
    %127 = vxpose.xlu0.b32.cont [7/16] 0.0, 128
    %128 = vxpose.xlu0.b32.cont [8/16] 0.0, 128
    %129 = vxpose.xlu0.b32.cont [9/16] 0.0, 128
    %130 = vxpose.xlu0.b32.cont [10/16] 0.0, 128
    %131 = vxpose.xlu0.b32.cont [11/16] 0.0, 128
    %132 = vxpose.xlu0.b32.cont [12/16] 0.0, 128
    %133 = vxpose.xlu0.b32.cont [13/16] 0.0, 128
    %134 = vxpose.xlu0.b32.cont [14/16] 0.0, 128
    %135 = vxpose.xlu0.b32.cont [15/16] 0.0, 128
    %136 = vxpose.xlu0.b32.end [16/16] 0.0, 128
    %v137 = vpop.trf.xlu0
    %v138 = vpop.trf.xlu0
    %v139 = vpop.trf.xlu0
    %v140 = vpop.trf.xlu0
    %v141 = vpop.trf.xlu0
    %v142 = vpop.trf.xlu0
    %v143 = vpop.trf.xlu0
    %v144 = vpop.trf.xlu0
    %v145 = vpop.trf.xlu0
    %v146 = vpop.trf.xlu0
    %v147 = vpop.trf.xlu0
    %v148 = vpop.trf.xlu0
    %v149 = vpop.trf.xlu0
    %v150 = vpop.trf.xlu0
    %v151 = vpop.trf.xlu0
    %v152 = vpop.trf.xlu0
    %vm153 = vcmask 64512
    %v155 = vsel %vm153, %v105, 0
    %v158 = vsel %vm153, %v106, 0
    %v161 = vsel %vm153, %v107, 0
    %v164 = vsel %vm153, %v108, 0
    %v167 = vsel %vm153, %v109, 0
    %v170 = vsel %vm153, %v110, 0
    %v173 = vsel %vm153, %v111, 0
    %v176 = vsel %vm153, %v112, 0
    %v179 = vsel %vm153, %v113, 0
    %v182 = vsel %vm153, %v114, 0
    %v185 = vsel %vm153, %v115, 0
    %v188 = vsel %vm153, %v116, 0
    %v191 = vsel %vm153, %v117, 0
    %v194 = vsel %vm153, %v118, 0
    %v197 = vsel %vm153, %v119, 0
    %v200 = vsel %vm153, %v120, 0
    %202 = vmatprep.subr.mxu0 0.0
    %203 = vmatpush1.msra.mxu0 %v47
    %204 = vmatprep.subr.mxu0 0.0
    %205 = vmatpush1.msra.mxu0 0.0
    %206 = vmatprep.subr.mxu0 0.0
    %207 = vmatpush1.msra.mxu0 0.0
    %208 = vmatprep.subr.mxu0 0.0
    %209 = vmatpush1.msra.mxu0 0.0
    %210 = vmatprep.subr.mxu0 0.0
    %211 = vmatpush1.msra.mxu0 0.0
    %212 = vmatprep.subr.mxu0 0.0
    %213 = vmatpush1.msra.mxu0 0.0
    %214 = vmatprep.subr.mxu0 0.0
    %215 = vmatpush1.msra.mxu0 0.0
    %216 = vmatprep.subr.mxu0 0.0
    %217 = vmatpush1.msra.mxu0 0.0
    %218 = vmatprep.subr.mxu0 0.0
    %219 = vmatpush1.msra.mxu0 0.0
    %220 = vmatprep.subr.mxu0 0.0
    %221 = vmatpush1.msra.mxu0 0.0
    %222 = vmatprep.subr.mxu0 0.0
    %223 = vmatpush1.msra.mxu0 0.0
    %224 = vmatprep.subr.mxu0 0.0
    %225 = vmatpush1.msra.mxu0 0.0
    %226 = vmatprep.subr.mxu0 0.0
    %227 = vmatpush1.msra.mxu0 0.0
    %228 = vmatprep.subr.mxu0 0.0
    %229 = vmatpush1.msra.mxu0 0.0
    %230 = vmatprep.subr.mxu0 0.0
    %231 = vmatpush1.msra.mxu0 0.0
    %232 = vmatprep.subr.mxu0 0.0
    %233 = vmatpush1.msra.mxu0 0.0
    %234 = vmatprep.subr.mxu0 0.0
    %235 = vmatpush1.msra.mxu0 0.0
    %236 = vmatprep.subr.mxu0 0.0
    %237 = vmatpush1.msra.mxu0 0.0
    %238 = vmatprep.subr.mxu0 0.0
    %239 = vmatpush1.msra.mxu0 0.0
    %240 = vmatprep.subr.mxu0 0.0
    %241 = vmatpush1.msra.mxu0 0.0
    %242 = vmatprep.subr.mxu0 0.0
    %243 = vmatpush1.msra.mxu0 0.0
    %244 = vmatprep.subr.mxu0 0.0
    %245 = vmatpush1.msra.mxu0 0.0
    %246 = vmatprep.subr.mxu0 0.0
    %247 = vmatpush1.msra.mxu0 0.0
    %248 = vmatprep.subr.mxu0 0.0
    %249 = vmatpush1.msra.mxu0 0.0
    %250 = vmatprep.subr.mxu0 0.0
    %251 = vmatpush1.msra.mxu0 0.0
    %252 = vmatprep.subr.mxu0 0.0
    %253 = vmatpush1.msra.mxu0 0.0
    %254 = vmatprep.subr.mxu0 0.0
    %255 = vmatpush1.msra.mxu0 0.0
    %256 = vmatprep.subr.mxu0 0.0
    %257 = vmatpush1.msra.mxu0 0.0
    %258 = vmatprep.subr.mxu0 0.0
    %259 = vmatpush1.msra.mxu0 0.0
    %260 = vmatprep.subr.mxu0 0.0
    %261 = vmatpush1.msra.mxu0 0.0
    %262 = vmatprep.subr.mxu0 0.0
    %263 = vmatpush1.msra.mxu0 0.0
    %264 = vmatprep.subr.mxu0 0.0
    %265 = vmatpush1.msra.mxu0 0.0
    %266 = vmatprep.mubr.f32.mxu0 0.0
    %267 = vmatmul.mubr.f32.gmra.mrb[0].mxu0 %v155
    %v268 = vpop.f32.mrb[0].mxu0
    %v269 = vadd.f32 0.0, %v268
    %v270 = vpop.f32.mrb[0].mxu0
    %271 = vmatprep.mubr.f32.mxu0 0.0
    %272 = vmatmul.mubr.f32.gmra.mrb[0].mxu0 %v158
    %v273 = vpop.f32.mrb[0].mxu0
    %v274 = vadd.f32 0.0, %v273
    %v275 = vpop.f32.mrb[0].mxu0
    %276 = vmatprep.mubr.f32.mxu0 0.0
    %277 = vmatmul.mubr.f32.gmra.mrb[0].mxu0 %v161
    %v278 = vpop.f32.mrb[0].mxu0
    %v279 = vadd.f32 0.0, %v278
    %v280 = vpop.f32.mrb[0].mxu0
    %281 = vmatprep.mubr.f32.mxu0 0.0
    %282 = vmatmul.mubr.f32.gmra.mrb[0].mxu0 %v164
    %v283 = vpop.f32.mrb[0].mxu0
    %v284 = vadd.f32 0.0, %v283
    %v285 = vpop.f32.mrb[0].mxu0
    %286 = vmatprep.mubr.f32.mxu0 0.0
    %287 = vmatmul.mubr.f32.gmra.mrb[0].mxu0 %v167
    %v288 = vpop.f32.mrb[0].mxu0
    %v289 = vadd.f32 0.0, %v288
    %v290 = vpop.f32.mrb[0].mxu0
    %291 = vmatprep.mubr.f32.mxu0 0.0
    %292 = vmatmul.mubr.f32.gmra.mrb[0].mxu0 %v170
    %v293 = vpop.f32.mrb[0].mxu0
    %v294 = vadd.f32 0.0, %v293
    %v295 = vpop.f32.mrb[0].mxu0
    %296 = vmatprep.mubr.f32.mxu0 0.0
    %297 = vmatmul.mubr.f32.gmra.mrb[0].mxu0 %v173
    %v298 = vpop.f32.mrb[0].mxu0
    %v299 = vadd.f32 0.0, %v298
    %v300 = vpop.f32.mrb[0].mxu0
    %301 = vmatprep.mubr.f32.mxu0 0.0
    %302 = vmatmul.mubr.f32.gmra.mrb[0].mxu0 %v176
    %v303 = vpop.f32.mrb[0].mxu0
    %v304 = vadd.f32 0.0, %v303
    %v305 = vpop.f32.mrb[0].mxu0
    %306 = vmatprep.mubr.f32.mxu0 0.0
    %307 = vmatmul.mubr.f32.gmra.mrb[0].mxu0 %v179
    %v308 = vpop.f32.mrb[0].mxu0
    %v309 = vadd.f32 0.0, %v308
    %v310 = vpop.f32.mrb[0].mxu0
    %311 = vmatprep.mubr.f32.mxu0 0.0
    %312 = vmatmul.mubr.f32.gmra.mrb[0].mxu0 %v182
    %v313 = vpop.f32.mrb[0].mxu0
    %v314 = vadd.f32 0.0, %v313
    %v315 = vpop.f32.mrb[0].mxu0
    %316 = vmatprep.mubr.f32.mxu0 0.0
    %317 = vmatmul.mubr.f32.gmra.mrb[0].mxu0 %v185
    %v318 = vpop.f32.mrb[0].mxu0
    %v319 = vadd.f32 0.0, %v318
    %v320 = vpop.f32.mrb[0].mxu0
    %321 = vmatprep.mubr.f32.mxu0 0.0
    %322 = vmatmul.mubr.f32.gmra.mrb[0].mxu0 %v188
    %v323 = vpop.f32.mrb[0].mxu0
    %v324 = vadd.f32 0.0, %v323
    %v325 = vpop.f32.mrb[0].mxu0
    %326 = vmatprep.mubr.f32.mxu0 0.0
    %327 = vmatmul.mubr.f32.gmra.mrb[0].mxu0 %v191
    %v328 = vpop.f32.mrb[0].mxu0
    %v329 = vadd.f32 0.0, %v328
    %v330 = vpop.f32.mrb[0].mxu0
    %331 = vmatprep.mubr.f32.mxu0 0.0
    %332 = vmatmul.mubr.f32.gmra.mrb[0].mxu0 %v194
    %v333 = vpop.f32.mrb[0].mxu0
    %v334 = vadd.f32 0.0, %v333
    %v335 = vpop.f32.mrb[0].mxu0
    %336 = vmatprep.mubr.f32.mxu0 0.0
    %337 = vmatmul.mubr.f32.gmra.mrb[0].mxu0 %v197
    %v338 = vpop.f32.mrb[0].mxu0
    %v339 = vadd.f32 0.0, %v338
    %v340 = vpop.f32.mrb[0].mxu0
    %341 = vmatprep.mubr.f32.mxu0 0.0
    %342 = vmatmul.mubr.f32.gmra.mrb[0].mxu0 %v200
    %v343 = vpop.f32.mrb[0].mxu0
    %v344 = vadd.f32 0.0, %v343
    %v345 = vpop.f32.mrb[0].mxu0
    %346 = vdwg.mxu0
    %v348 = vsel %vm153, %v137, 0
    %v351 = vsel %vm153, %v138, 0
    %v354 = vsel %vm153, %v139, 0
    %v357 = vsel %vm153, %v140, 0
    %v360 = vsel %vm153, %v141, 0
    %v363 = vsel %vm153, %v142, 0
    %v366 = vsel %vm153, %v143, 0
    %v369 = vsel %vm153, %v144, 0
    %v372 = vsel %vm153, %v145, 0
    %v375 = vsel %vm153, %v146, 0
    %v378 = vsel %vm153, %v147, 0
    %v381 = vsel %vm153, %v148, 0
    %v384 = vsel %vm153, %v149, 0
    %v387 = vsel %vm153, %v150, 0
    %v390 = vsel %vm153, %v151, 0
    %v393 = vsel %vm153, %v152, 0
    %395 = vmatprep.subr.mxu0 0.0
    %396 = vmatpush1.msra.mxu0 %v48
    %397 = vmatprep.subr.mxu0 0.0
    %398 = vmatpush1.msra.mxu0 0.0
    %399 = vmatprep.subr.mxu0 0.0
    %400 = vmatpush1.msra.mxu0 0.0
    %401 = vmatprep.subr.mxu0 0.0
    %402 = vmatpush1.msra.mxu0 0.0
    %403 = vmatprep.subr.mxu0 0.0
    %404 = vmatpush1.msra.mxu0 0.0
    %405 = vmatprep.subr.mxu0 0.0
    %406 = vmatpush1.msra.mxu0 0.0
    %407 = vmatprep.subr.mxu0 0.0
    %408 = vmatpush1.msra.mxu0 0.0
    %409 = vmatprep.subr.mxu0 0.0
    %410 = vmatpush1.msra.mxu0 0.0
    %411 = vmatprep.subr.mxu0 0.0
    %412 = vmatpush1.msra.mxu0 0.0
    %413 = vmatprep.subr.mxu0 0.0
    %414 = vmatpush1.msra.mxu0 0.0
    %415 = vmatprep.subr.mxu0 0.0
    %416 = vmatpush1.msra.mxu0 0.0
    %417 = vmatprep.subr.mxu0 0.0
    %418 = vmatpush1.msra.mxu0 0.0
    %419 = vmatprep.subr.mxu0 0.0
    %420 = vmatpush1.msra.mxu0 0.0
    %421 = vmatprep.subr.mxu0 0.0
    %422 = vmatpush1.msra.mxu0 0.0
    %423 = vmatprep.subr.mxu0 0.0
    %424 = vmatpush1.msra.mxu0 0.0
    %425 = vmatprep.subr.mxu0 0.0
    %426 = vmatpush1.msra.mxu0 0.0
    %427 = vmatprep.subr.mxu0 0.0
    %428 = vmatpush1.msra.mxu0 0.0
    %429 = vmatprep.subr.mxu0 0.0
    %430 = vmatpush1.msra.mxu0 0.0
    %431 = vmatprep.subr.mxu0 0.0
    %432 = vmatpush1.msra.mxu0 0.0
    %433 = vmatprep.subr.mxu0 0.0
    %434 = vmatpush1.msra.mxu0 0.0
    %435 = vmatprep.subr.mxu0 0.0
    %436 = vmatpush1.msra.mxu0 0.0
    %437 = vmatprep.subr.mxu0 0.0
    %438 = vmatpush1.msra.mxu0 0.0
    %439 = vmatprep.subr.mxu0 0.0
    %440 = vmatpush1.msra.mxu0 0.0
    %441 = vmatprep.subr.mxu0 0.0
    %442 = vmatpush1.msra.mxu0 0.0
    %443 = vmatprep.subr.mxu0 0.0
    %444 = vmatpush1.msra.mxu0 0.0
    %445 = vmatprep.subr.mxu0 0.0
    %446 = vmatpush1.msra.mxu0 0.0
    %447 = vmatprep.subr.mxu0 0.0
    %448 = vmatpush1.msra.mxu0 0.0
    %449 = vmatprep.subr.mxu0 0.0
    %450 = vmatpush1.msra.mxu0 0.0
    %451 = vmatprep.subr.mxu0 0.0
    %452 = vmatpush1.msra.mxu0 0.0
    %453 = vmatprep.subr.mxu0 0.0
    %454 = vmatpush1.msra.mxu0 0.0
    %455 = vmatprep.subr.mxu0 0.0
    %456 = vmatpush1.msra.mxu0 0.0
    %457 = vmatprep.subr.mxu0 0.0
    %458 = vmatpush1.msra.mxu0 0.0
    %459 = vmatprep.mubr.f32.mxu0 0.0
    %460 = vmatmul.mubr.f32.gmra.mrb[0].mxu0 %v348
    %v461 = vpop.f32.mrb[0].mxu0
    %v462 = vadd.f32 0.0, %v461
    %v463 = vpop.f32.mrb[0].mxu0
    %464 = vmatprep.mubr.f32.mxu0 0.0
    %465 = vmatmul.mubr.f32.gmra.mrb[0].mxu0 %v351
    %v466 = vpop.f32.mrb[0].mxu0
    %v467 = vadd.f32 0.0, %v466
    %v468 = vpop.f32.mrb[0].mxu0
    %469 = vmatprep.mubr.f32.mxu0 0.0
    %470 = vmatmul.mubr.f32.gmra.mrb[0].mxu0 %v354
    %v471 = vpop.f32.mrb[0].mxu0
    %v472 = vadd.f32 0.0, %v471
    %v473 = vpop.f32.mrb[0].mxu0
    %474 = vmatprep.mubr.f32.mxu0 0.0
    %475 = vmatmul.mubr.f32.gmra.mrb[0].mxu0 %v357
    %v476 = vpop.f32.mrb[0].mxu0
    %v477 = vadd.f32 0.0, %v476
    %v478 = vpop.f32.mrb[0].mxu0
    %479 = vmatprep.mubr.f32.mxu0 0.0
    %480 = vmatmul.mubr.f32.gmra.mrb[0].mxu0 %v360
    %v481 = vpop.f32.mrb[0].mxu0
    %v482 = vadd.f32 0.0, %v481
    %v483 = vpop.f32.mrb[0].mxu0
    %484 = vmatprep.mubr.f32.mxu0 0.0
    %485 = vmatmul.mubr.f32.gmra.mrb[0].mxu0 %v363
    %v486 = vpop.f32.mrb[0].mxu0
    %v487 = vadd.f32 0.0, %v486
    %v488 = vpop.f32.mrb[0].mxu0
    %489 = vmatprep.mubr.f32.mxu0 0.0
    %490 = vmatmul.mubr.f32.gmra.mrb[0].mxu0 %v366
    %v491 = vpop.f32.mrb[0].mxu0
    %v492 = vadd.f32 0.0, %v491
    %v493 = vpop.f32.mrb[0].mxu0
    %494 = vmatprep.mubr.f32.mxu0 0.0
    %495 = vmatmul.mubr.f32.gmra.mrb[0].mxu0 %v369
    %v496 = vpop.f32.mrb[0].mxu0
    %v497 = vadd.f32 0.0, %v496
    %v498 = vpop.f32.mrb[0].mxu0
    %499 = vmatprep.mubr.f32.mxu0 0.0
    %500 = vmatmul.mubr.f32.gmra.mrb[0].mxu0 %v372
    %v501 = vpop.f32.mrb[0].mxu0
    %v502 = vadd.f32 0.0, %v501
    %v503 = vpop.f32.mrb[0].mxu0
    %504 = vmatprep.mubr.f32.mxu0 0.0
    %505 = vmatmul.mubr.f32.gmra.mrb[0].mxu0 %v375
    %v506 = vpop.f32.mrb[0].mxu0
    %v507 = vadd.f32 0.0, %v506
    %v508 = vpop.f32.mrb[0].mxu0
    %509 = vmatprep.mubr.f32.mxu0 0.0
    %510 = vmatmul.mubr.f32.gmra.mrb[0].mxu0 %v378
    %v511 = vpop.f32.mrb[0].mxu0
    %v512 = vadd.f32 0.0, %v511
    %v513 = vpop.f32.mrb[0].mxu0
    %514 = vmatprep.mubr.f32.mxu0 0.0
    %515 = vmatmul.mubr.f32.gmra.mrb[0].mxu0 %v381
    %v516 = vpop.f32.mrb[0].mxu0
    %v517 = vadd.f32 0.0, %v516
    %v518 = vpop.f32.mrb[0].mxu0
    %519 = vmatprep.mubr.f32.mxu0 0.0
    %520 = vmatmul.mubr.f32.gmra.mrb[0].mxu0 %v384
    %v521 = vpop.f32.mrb[0].mxu0
    %v522 = vadd.f32 0.0, %v521
    %v523 = vpop.f32.mrb[0].mxu0
    %524 = vmatprep.mubr.f32.mxu0 0.0
    %525 = vmatmul.mubr.f32.gmra.mrb[0].mxu0 %v387
    %v526 = vpop.f32.mrb[0].mxu0
    %v527 = vadd.f32 0.0, %v526
    %v528 = vpop.f32.mrb[0].mxu0
    %529 = vmatprep.mubr.f32.mxu0 0.0
    %530 = vmatmul.mubr.f32.gmra.mrb[0].mxu0 %v390
    %v531 = vpop.f32.mrb[0].mxu0
    %v532 = vadd.f32 0.0, %v531
    %v533 = vpop.f32.mrb[0].mxu0
    %534 = vmatprep.mubr.f32.mxu0 0.0
    %535 = vmatmul.mubr.f32.gmra.mrb[0].mxu0 %v393
    %v536 = vpop.f32.mrb[0].mxu0
    %v537 = vadd.f32 0.0, %v536
    %v538 = vpop.f32.mrb[0].mxu0
    %539 = vdwg.mxu0
    %540 = vmatprep.subr.mxu0 0.0
    %541 = vmatpush1.msra.mxu0 %v269
    %542 = vmatprep.subr.mxu0 0.0
    %543 = vmatpush1.msra.mxu0 %v274
    %544 = vmatprep.subr.mxu0 0.0
    %545 = vmatpush1.msra.mxu0 %v279
    %546 = vmatprep.subr.mxu0 0.0
    %547 = vmatpush1.msra.mxu0 %v284
    %548 = vmatprep.subr.mxu0 0.0
    %549 = vmatpush1.msra.mxu0 %v289
    %550 = vmatprep.subr.mxu0 0.0
    %551 = vmatpush1.msra.mxu0 %v294
    %552 = vmatprep.subr.mxu0 0.0
    %553 = vmatpush1.msra.mxu0 %v299
    %554 = vmatprep.subr.mxu0 0.0
    %555 = vmatpush1.msra.mxu0 %v304
    %556 = vmatprep.subr.mxu0 0.0
    %557 = vmatpush1.msra.mxu0 %v309
    %558 = vmatprep.subr.mxu0 0.0
    %559 = vmatpush1.msra.mxu0 %v314
    %560 = vmatprep.subr.mxu0 0.0
    %561 = vmatpush1.msra.mxu0 %v319
    %562 = vmatprep.subr.mxu0 0.0
    %563 = vmatpush1.msra.mxu0 %v324
    %564 = vmatprep.subr.mxu0 0.0
    %565 = vmatpush1.msra.mxu0 %v329
    %566 = vmatprep.subr.mxu0 0.0
    %567 = vmatpush1.msra.mxu0 %v334
    %568 = vmatprep.subr.mxu0 0.0
    %569 = vmatpush1.msra.mxu0 %v339
    %570 = vmatprep.subr.mxu0 0.0
    %571 = vmatpush1.msra.mxu0 %v344
    %572 = vmatprep.subr.mxu0 0.0
    %573 = vmatpush1.msra.mxu0 0.0
    %574 = vmatprep.subr.mxu0 0.0
    %575 = vmatpush1.msra.mxu0 0.0
    %576 = vmatprep.subr.mxu0 0.0
    %577 = vmatpush1.msra.mxu0 0.0
    %578 = vmatprep.subr.mxu0 0.0
    %579 = vmatpush1.msra.mxu0 0.0
    %580 = vmatprep.subr.mxu0 0.0
    %581 = vmatpush1.msra.mxu0 0.0
    %582 = vmatprep.subr.mxu0 0.0
    %583 = vmatpush1.msra.mxu0 0.0
    %584 = vmatprep.subr.mxu0 0.0
    %585 = vmatpush1.msra.mxu0 0.0
    %586 = vmatprep.subr.mxu0 0.0
    %587 = vmatpush1.msra.mxu0 0.0
    %588 = vmatprep.subr.mxu0 0.0
    %589 = vmatpush1.msra.mxu0 0.0
    %590 = vmatprep.subr.mxu0 0.0
    %591 = vmatpush1.msra.mxu0 0.0
    %592 = vmatprep.subr.mxu0 0.0
    %593 = vmatpush1.msra.mxu0 0.0
    %594 = vmatprep.subr.mxu0 0.0
    %595 = vmatpush1.msra.mxu0 0.0
    %596 = vmatprep.subr.mxu0 0.0
    %597 = vmatpush1.msra.mxu0 0.0
    %598 = vmatprep.subr.mxu0 0.0
    %599 = vmatpush1.msra.mxu0 0.0
    %600 = vmatprep.subr.mxu0 0.0
    %601 = vmatpush1.msra.mxu0 0.0
    %602 = vmatprep.subr.mxu0 0.0
    %603 = vmatpush1.msra.mxu0 0.0
    %604 = vmatprep.mubr.f32.mxu0 0.0
    %605 = vmatmul.mubr.f32.gmra.mrb[0].mxu0 %v31
    %v606 = vpop.f32.mrb[0].mxu0
    %v607 = vadd.f32 0.0, %v606
    %v608 = vpop.f32.mrb[0].mxu0
    %609 = vdwg.mxu0
    %610 = vmatprep.subr.mxu0 0.0
    %611 = vmatpush1.msra.mxu0 %v462
    %612 = vmatprep.subr.mxu0 0.0
    %613 = vmatpush1.msra.mxu0 %v467
    %614 = vmatprep.subr.mxu0 0.0
    %615 = vmatpush1.msra.mxu0 %v472
    %616 = vmatprep.subr.mxu0 0.0
    %617 = vmatpush1.msra.mxu0 %v477
    %618 = vmatprep.subr.mxu0 0.0
    %619 = vmatpush1.msra.mxu0 %v482
    %620 = vmatprep.subr.mxu0 0.0
    %621 = vmatpush1.msra.mxu0 %v487
    %622 = vmatprep.subr.mxu0 0.0
    %623 = vmatpush1.msra.mxu0 %v492
    %624 = vmatprep.subr.mxu0 0.0
    %625 = vmatpush1.msra.mxu0 %v497
    %626 = vmatprep.subr.mxu0 0.0
    %627 = vmatpush1.msra.mxu0 %v502
    %628 = vmatprep.subr.mxu0 0.0
    %629 = vmatpush1.msra.mxu0 %v507
    %630 = vmatprep.subr.mxu0 0.0
    %631 = vmatpush1.msra.mxu0 %v512
    %632 = vmatprep.subr.mxu0 0.0
    %633 = vmatpush1.msra.mxu0 %v517
    %634 = vmatprep.subr.mxu0 0.0
    %635 = vmatpush1.msra.mxu0 %v522
    %636 = vmatprep.subr.mxu0 0.0
    %637 = vmatpush1.msra.mxu0 %v527
    %638 = vmatprep.subr.mxu0 0.0
    %639 = vmatpush1.msra.mxu0 %v532
    %640 = vmatprep.subr.mxu0 0.0
    %641 = vmatpush1.msra.mxu0 %v537
    %642 = vmatprep.subr.mxu0 0.0
    %643 = vmatpush1.msra.mxu0 0.0
    %644 = vmatprep.subr.mxu0 0.0
    %645 = vmatpush1.msra.mxu0 0.0
    %646 = vmatprep.subr.mxu0 0.0
    %647 = vmatpush1.msra.mxu0 0.0
    %648 = vmatprep.subr.mxu0 0.0
    %649 = vmatpush1.msra.mxu0 0.0
    %650 = vmatprep.subr.mxu0 0.0
    %651 = vmatpush1.msra.mxu0 0.0
    %652 = vmatprep.subr.mxu0 0.0
    %653 = vmatpush1.msra.mxu0 0.0
    %654 = vmatprep.subr.mxu0 0.0
    %655 = vmatpush1.msra.mxu0 0.0
    %656 = vmatprep.subr.mxu0 0.0
    %657 = vmatpush1.msra.mxu0 0.0
    %658 = vmatprep.subr.mxu0 0.0
    %659 = vmatpush1.msra.mxu0 0.0
    %660 = vmatprep.subr.mxu0 0.0
    %661 = vmatpush1.msra.mxu0 0.0
    %662 = vmatprep.subr.mxu0 0.0
    %663 = vmatpush1.msra.mxu0 0.0
    %664 = vmatprep.subr.mxu0 0.0
    %665 = vmatpush1.msra.mxu0 0.0
    %666 = vmatprep.subr.mxu0 0.0
    %667 = vmatpush1.msra.mxu0 0.0
    %668 = vmatprep.subr.mxu0 0.0
    %669 = vmatpush1.msra.mxu0 0.0
    %670 = vmatprep.subr.mxu0 0.0
    %671 = vmatpush1.msra.mxu0 0.0
    %672 = vmatprep.subr.mxu0 0.0
    %673 = vmatpush1.msra.mxu0 0.0
    %674 = vmatprep.mubr.f32.mxu0 0.0
    %675 = vmatmul.mubr.f32.gmra.mrb[0].mxu0 %v32
    %v676 = vpop.f32.mrb[0].mxu0
    %v677 = vadd.f32 0.0, %v676
    %v678 = vpop.f32.mrb[0].mxu0
    %679 = vdwg.mxu0
    %v680 = vmul.f32 %v52, 0.03125
    %v681 = vmul.f32 %v54, 0.03125
    %v682 = vmul.f32 %v80, 0.03125
    %v683 = vmul.f32 %v86, 0.03125
    %v684 = vmul.f32 %v680, %v66
    %v685 = vmul.f32 %v681, %v72
    %v686 = vsub.f32 %v607, %v684
    %v687 = vsub.f32 %v677, %v685
    %v688 = vsub.f32 %v686, %v682
    %v689 = vsub.f32 %v687, %v683
    %690 = vst [vmem:[#allocation5] sm:$0xff] %v688
    %691 = vst [vmem:[#allocation5 + $0x8] sm:$0xff] %v689
    // Predicated region
    $region18: #{tpu_custom_call.1} parent=1 // pred_check
      _
    $region19: #{tpu_custom_call.1} parent=1 // pred_check_branch
      %693 = sbr.rel (0) target = $region21
    $region20: #{tpu_custom_call.1} parent=1 // pred_region
      %s695 = ssub.s32 256, 256
      %696 = vsyncadd [#allocation4], %s695
      %s697 = sshll.u32 [#allocation5], 4
      %s698 = int_to_ptr.vmem [resolvable:$true] %s697
      %703 = dma.vmem_to_hbm [thread:$0]  %s698, 256, %s3, [#allocation4], 128, 128, 8
    $region21: #{tpu_custom_call.1} parent=1 // pred_fallthru
      _
    // Predicated region
    $region22: #{tpu_custom_call.1} parent=1 // pred_check
      _
    $region23: #{tpu_custom_call.1} parent=1 // pred_check_branch
      %705 = sbr.rel (0) target = $region25
    $region24: #{tpu_custom_call.1} parent=1 // pred_region
      %706 = dma.done [#allocation4], 256
    $region25: #{tpu_custom_call.1} parent=1 // pred_fallthru
      _
    %707 = vsyncpa [#allocation3], 1
    %708 = vsyncpa [#allocation4], 1

</llo_original>
